<compile_context>
chip_gen: v5e
topology: v5e:2x2
jax: 0.10.0
libtpu: 0.0.40
codegen_flags: <defaults>
</compile_context>

<pallas_src>
import jax
import jax.numpy as jnp
from jax import lax
from jax.experimental import pallas as pl
from jax.experimental.pallas import tpu as pltpu

HIDDEN = 128        # hidden_size in the PyTorch module
NEG_SLOPE = 0.3


def _leaky_relu(v, slope=NEG_SLOPE):
    return jnp.where(v > 0, v, slope * v)


def dqn_kernel(x_ref,                                  # VMEM (TB, T, F) f32
               len_ref,                                # VMEM (TB, 1) int32
               w1_ref, b1_ref, w2_ref, b2_ref,
               w3_ref, b3_ref, w4_ref, b4_ref,         # VMEM, resident across grid
               out_ref):                               # VMEM (TB, A) f32
    TB, T, F = x_ref.shape

    x = x_ref[...]                                               # (TB, T, F)
    # last valid timestep per row; lengths<=0 clamp to t=0 (intentional
    # robustness choice vs. PyTorch's pack/pad path, which would error).
    t_idx = jnp.clip(len_ref[...] - 1, 0, T - 1)                 # (TB, 1)
    t_iota = lax.broadcasted_iota(jnp.int32, (TB, T, F), 1)      # (TB, T, F)
    mask = (t_iota == t_idx[:, :, None]).astype(x.dtype)         # one-hot over T
    sel = jnp.sum(x * mask, axis=1)                              # (TB, F)

    h = _leaky_relu(jnp.dot(sel, w1_ref[...],
                            preferred_element_type=jnp.float32) + b1_ref[...])
    h = _leaky_relu(jnp.dot(h, w2_ref[...],
                            preferred_element_type=jnp.float32) + b2_ref[...])
    h = _leaky_relu(jnp.dot(h, w3_ref[...],
                            preferred_element_type=jnp.float32) + b3_ref[...])
    out = jnp.dot(h, w4_ref[...],
                  preferred_element_type=jnp.float32) + b4_ref[...]
    out_ref[...] = out.astype(out_ref.dtype)


def init_params(state_size, action_size, seed=0):
    """Deterministic init mirroring torch.nn.Linear default:
    U(-1/sqrt(fan_in), 1/sqrt(fan_in)) for weights and biases.
    Weights stored as (in_features, out_features) == W.T vs PyTorch."""
    key = jax.random.PRNGKey(seed)
    dims = [(state_size, HIDDEN), (HIDDEN, 64), (64, 32), (32, action_size)]
    params = []
    for (fan_in, fan_out) in dims:
        key, kw, kb = jax.random.split(key, 3)
        bound = 1.0 / jnp.sqrt(jnp.float32(fan_in))
        w = jax.random.uniform(kw, (fan_in, fan_out), jnp.float32,
                               minval=-bound, maxval=bound)
        b = jax.random.uniform(kb, (1, fan_out), jnp.float32,
                               minval=-bound, maxval=bound)
        params += [w, b]
    return params


def _round_up(v, m):
    return ((v + m - 1) // m) * m


def dqn_forward(x_padded, lengths, params, action_size, *, tb_max=256):
    """x_padded: (B, T, F) float32 ; lengths: (B,) int32.
    Returns (out (B, action_size), 42) — matching the torch module."""
    B, T, F = x_padded.shape
    A = int(action_size)
    w1, b1, w2, b2, w3, b3, w4, b4 = params

    # --- batch tile selection -------------------------------------------------
    # * >= 2 grid steps whenever B allows it, so the "parallel" batch axis can
    #   split across v7x's two TensorCores.
    # * cap TB so the double-buffered (TB, T, F) input tile stays within a
    #   conservative VMEM budget (safe on v7x's smaller VMEM as well).
    # * tb_max=256 amortizes per-grid-step overhead on v5e/v6e.
    row_bytes = T * F * 4
    vmem_rows = max(8, (((12 * 1024 * 1024) // max(1, 2 * row_bytes)) // 8) * 8)
    TB = int(max(8, min(tb_max, vmem_rows, _round_up(-(-B // 2), 8))))
    n_tiles = -(-B // TB)
    B_pad = n_tiles * TB

    # Pad the batch axis (no-op copies when B is already a multiple of TB).
    lens = lengths.astype(jnp.int32)
    if B_pad != B:
        x_padded = jnp.pad(x_padded, ((0, B_pad - B), (0, 0), (0, 0)))
        lens = jnp.pad(lens, (0, B_pad - B), constant_values=1)
    lens = lens.reshape(B_pad, 1)

    def resident(arr):
        nd = arr.ndim
        return pl.BlockSpec(arr.shape, lambda i, _nd=nd: (0,) * _nd)

    flops = (2 * B_pad * (F * HIDDEN + HIDDEN * 64 + 64 * 32 + 32 * A)
             + 2 * B_pad * T * F)
    bytes_accessed = 4 * (B_pad * T * F + B_pad * A + B_pad
                          + F * HIDDEN + HIDDEN * 64 + 64 * 32 + 32 * A
                          + HIDDEN + 64 + 32 + A)

    out_padded = pl.pallas_call(
        dqn_kernel,
        grid=(n_tiles,),
        in_specs=[
            pl.BlockSpec((TB, T, F), lambda i: (i, 0, 0)),   # dense auto-pipelined x tile
            pl.BlockSpec((TB, 1), lambda i: (i, 0)),          # per-row lengths
            resident(w1), resident(b1),
            resident(w2), resident(b2),
            resident(w3), resident(b3),
            resident(w4), resident(b4),
        ],
        out_specs=pl.BlockSpec((TB, A), lambda i: (i, 0)),     # true-width output
        out_shape=jax.ShapeDtypeStruct((B_pad, A), jnp.float32),
        compiler_params=pltpu.CompilerParams(
            dimension_semantics=("parallel",),
            vmem_limit_bytes=32 * 1024 * 1024),
        cost_estimate=pl.CostEstimate(flops=flops, transcendentals=0,
                                      bytes_accessed=bytes_accessed),
    )(x_padded, lens, w1, b1, w2, b2, w3, b3, w4, b4)

    return out_padded[:B], 42


if __name__ == "__main__":
    B, T = 2, 8
    state_size, action_size = 16, 8

    key = jax.random.PRNGKey(0)
    kx, _ = jax.random.split(key)
    x = jax.random.normal(kx, (B, T, state_size), jnp.float32)
    # valid lengths per sequence (1..T), deterministic
    lengths = jnp.array([T, T // 2], dtype=jnp.int32)

    params = init_params(state_size, action_size, seed=0)

    out, const = dqn_forward(x, lengths, params, action_size)
    out = jax.block_until_ready(out)

    # pure-JAX reference (mirrors the torch forward)
    def ref_forward(x, lengths, params):
        sel = x[jnp.arange(x.shape[0]), lengths - 1]
        w1, b1, w2, b2, w3, b3, w4, b4 = params
        lr = lambda v: jnp.where(v > 0, v, 0.3 * v)
        h = lr(sel @ w1 + b1)
        h = lr(h @ w2 + b2)
        h = lr(h @ w3 + b3)
        return h @ w4 + b4

    ref = ref_forward(x, lengths, params)
    assert out.shape == (B, action_size)
    assert const == 42
    assert jnp.allclose(out, ref, atol=1e-5, rtol=1e-5)
    print("KERNEL_OK")
</pallas_src>

<mosaic_0001>
module attributes {stable_mosaic.version = 11 : i64} {
  func.func @dqn_kernel(%arg0: i32, %arg1: memref<8x8x16xf32, #tpu.memory_space<vmem>>, %arg2: memref<8x1xi32, #tpu.memory_space<vmem>>, %arg3: memref<16x128xf32, #tpu.memory_space<vmem>>, %arg4: memref<1x128xf32, #tpu.memory_space<vmem>>, %arg5: memref<128x64xf32, #tpu.memory_space<vmem>>, %arg6: memref<1x64xf32, #tpu.memory_space<vmem>>, %arg7: memref<64x32xf32, #tpu.memory_space<vmem>>, %arg8: memref<1x32xf32, #tpu.memory_space<vmem>>, %arg9: memref<32x8xf32, #tpu.memory_space<vmem>>, %arg10: memref<1x8xf32, #tpu.memory_space<vmem>>, %arg11: memref<8x8xf32, #tpu.memory_space<vmem>>) attributes {dimension_semantics = [#tpu.dimension_semantics<parallel>], iteration_bounds = array<i64: 1>, scalar_prefetch = 0 : i64, scratch_operands = 0 : i64, tpu.core_type = #tpu.core_type<tc>, window_params = [{transform_indices = @transform_0, window_bounds = array<i64: 8, 8, 16>}, {transform_indices = @transform_1, window_bounds = array<i64: 8, 1>}, {pipeline_mode = #tpu.pipeline_mode<synchronous>, transform_indices = @transform_2, window_bounds = array<i64: 16, 128>}, {pipeline_mode = #tpu.pipeline_mode<synchronous>, transform_indices = @transform_3, window_bounds = array<i64: 1, 128>}, {pipeline_mode = #tpu.pipeline_mode<synchronous>, transform_indices = @transform_4, window_bounds = array<i64: 128, 64>}, {pipeline_mode = #tpu.pipeline_mode<synchronous>, transform_indices = @transform_5, window_bounds = array<i64: 1, 64>}, {pipeline_mode = #tpu.pipeline_mode<synchronous>, transform_indices = @transform_6, window_bounds = array<i64: 64, 32>}, {pipeline_mode = #tpu.pipeline_mode<synchronous>, transform_indices = @transform_7, window_bounds = array<i64: 1, 32>}, {pipeline_mode = #tpu.pipeline_mode<synchronous>, transform_indices = @transform_8, window_bounds = array<i64: 32, 8>}, {pipeline_mode = #tpu.pipeline_mode<synchronous>, transform_indices = @transform_9, window_bounds = array<i64: 1, 8>}, {transform_indices = @transform_10, window_bounds = array<i64: 8, 8>}]} {
    %c0 = arith.constant 0 : index
    %c0_0 = arith.constant 0 : index
    %c0_1 = arith.constant 0 : index
    %0 = vector.load %arg1[%c0, %c0_0, %c0_1] : memref<8x8x16xf32, #tpu.memory_space<vmem>>, vector<8x8x16xf32>
    %c0_2 = arith.constant 0 : index
    %c0_3 = arith.constant 0 : index
    %1 = vector.load %arg2[%c0_2, %c0_3] : memref<8x1xi32, #tpu.memory_space<vmem>>, vector<8x1xi32>
    %c1_i32 = arith.constant 1 : i32
    %2 = vector.broadcast %c1_i32 : i32 to vector<8x1xi32>
    %3 = arith.subi %1, %2 : vector<8x1xi32>
    %c0_i32 = arith.constant 0 : i32
    %c7_i32 = arith.constant 7 : i32
    %4 = vector.broadcast %c0_i32 : i32 to vector<8x1xi32>
    %5 = arith.maxsi %4, %3 : vector<8x1xi32>
    %6 = vector.broadcast %c7_i32 : i32 to vector<8x1xi32>
    %7 = arith.minsi %6, %5 : vector<8x1xi32>
    %8 = tpu.iota {dimensions = array<i32: 1>} : vector<8x8x16xi32>
    %9 = vector.shape_cast %7 : vector<8x1xi32> to vector<8x1x1xi32>
    %10 = vector.broadcast %9 : vector<8x1x1xi32> to vector<8x8x16xi32>
    %11 = arith.cmpi eq, %8, %10 : vector<8x8x16xi32>
    %12 = arith.extui %11 : vector<8x8x16xi1> to vector<8x8x16xi32>
    %13 = arith.sitofp %12 : vector<8x8x16xi32> to vector<8x8x16xf32>
    %14 = arith.mulf %0, %13 : vector<8x8x16xf32>
    %cst = arith.constant dense<0.000000e+00> : vector<8x16xf32>
    %15 = vector.multi_reduction <add>, %14, %cst [1] : vector<8x8x16xf32> to vector<8x16xf32>
    %c0_4 = arith.constant 0 : index
    %c0_5 = arith.constant 0 : index
    %16 = vector.load %arg3[%c0_4, %c0_5] : memref<16x128xf32, #tpu.memory_space<vmem>>, vector<16x128xf32>
    %cst_6 = arith.constant dense<0.000000e+00> : vector<8x128xf32>
    %17 = tpu.matmul %15, %16, %cst_6 {dimension_numbers = #tpu.dot_dimension_numbers<[1], [0], [0], [1], [0, 0, 1, 1], [], []>} : vector<8x16xf32>, vector<16x128xf32>, vector<8x128xf32> -> vector<8x128xf32>
    %c0_7 = arith.constant 0 : index
    %c0_8 = arith.constant 0 : index
    %18 = vector.load %arg4[%c0_7, %c0_8] : memref<1x128xf32, #tpu.memory_space<vmem>>, vector<1x128xf32>
    %19 = vector.broadcast %18 : vector<1x128xf32> to vector<8x128xf32>
    %20 = arith.addf %17, %19 : vector<8x128xf32>
    %cst_9 = arith.constant 0.000000e+00 : f32
    %21 = vector.broadcast %cst_9 : f32 to vector<8x128xf32>
    %22 = arith.cmpf ogt, %20, %21 : vector<8x128xf32>
    %cst_10 = arith.constant 3.000000e-01 : f32
    %23 = vector.broadcast %cst_10 : f32 to vector<8x128xf32>
    %24 = arith.mulf %23, %20 : vector<8x128xf32>
    %25 = arith.select %22, %20, %24 : vector<8x128xi1>, vector<8x128xf32>
    %c0_11 = arith.constant 0 : index
    %c0_12 = arith.constant 0 : index
    %26 = vector.load %arg5[%c0_11, %c0_12] : memref<128x64xf32, #tpu.memory_space<vmem>>, vector<128x64xf32>
    %cst_13 = arith.constant dense<0.000000e+00> : vector<8x64xf32>
    %27 = tpu.matmul %25, %26, %cst_13 {dimension_numbers = #tpu.dot_dimension_numbers<[1], [0], [0], [1], [0, 0, 1, 1], [], []>} : vector<8x128xf32>, vector<128x64xf32>, vector<8x64xf32> -> vector<8x64xf32>
    %c0_14 = arith.constant 0 : index
    %c0_15 = arith.constant 0 : index
    %28 = vector.load %arg6[%c0_14, %c0_15] : memref<1x64xf32, #tpu.memory_space<vmem>>, vector<1x64xf32>
    %29 = vector.broadcast %28 : vector<1x64xf32> to vector<8x64xf32>
    %30 = arith.addf %27, %29 : vector<8x64xf32>
    %cst_16 = arith.constant 0.000000e+00 : f32
    %31 = vector.broadcast %cst_16 : f32 to vector<8x64xf32>
    %32 = arith.cmpf ogt, %30, %31 : vector<8x64xf32>
    %cst_17 = arith.constant 3.000000e-01 : f32
    %33 = vector.broadcast %cst_17 : f32 to vector<8x64xf32>
    %34 = arith.mulf %33, %30 : vector<8x64xf32>
    %35 = arith.select %32, %30, %34 : vector<8x64xi1>, vector<8x64xf32>
    %c0_18 = arith.constant 0 : index
    %c0_19 = arith.constant 0 : index
    %36 = vector.load %arg7[%c0_18, %c0_19] : memref<64x32xf32, #tpu.memory_space<vmem>>, vector<64x32xf32>
    %cst_20 = arith.constant dense<0.000000e+00> : vector<8x32xf32>
    %37 = tpu.matmul %35, %36, %cst_20 {dimension_numbers = #tpu.dot_dimension_numbers<[1], [0], [0], [1], [0, 0, 1, 1], [], []>} : vector<8x64xf32>, vector<64x32xf32>, vector<8x32xf32> -> vector<8x32xf32>
    %c0_21 = arith.constant 0 : index
    %c0_22 = arith.constant 0 : index
    %38 = vector.load %arg8[%c0_21, %c0_22] : memref<1x32xf32, #tpu.memory_space<vmem>>, vector<1x32xf32>
    %39 = vector.broadcast %38 : vector<1x32xf32> to vector<8x32xf32>
    %40 = arith.addf %37, %39 : vector<8x32xf32>
    %cst_23 = arith.constant 0.000000e+00 : f32
    %41 = vector.broadcast %cst_23 : f32 to vector<8x32xf32>
    %42 = arith.cmpf ogt, %40, %41 : vector<8x32xf32>
    %cst_24 = arith.constant 3.000000e-01 : f32
    %43 = vector.broadcast %cst_24 : f32 to vector<8x32xf32>
    %44 = arith.mulf %43, %40 : vector<8x32xf32>
    %45 = arith.select %42, %40, %44 : vector<8x32xi1>, vector<8x32xf32>
    %c0_25 = arith.constant 0 : index
    %c0_26 = arith.constant 0 : index
    %46 = vector.load %arg9[%c0_25, %c0_26] : memref<32x8xf32, #tpu.memory_space<vmem>>, vector<32x8xf32>
    %cst_27 = arith.constant dense<0.000000e+00> : vector<8x8xf32>
    %47 = tpu.matmul %45, %46, %cst_27 {dimension_numbers = #tpu.dot_dimension_numbers<[1], [0], [0], [1], [0, 0, 1, 1], [], []>} : vector<8x32xf32>, vector<32x8xf32>, vector<8x8xf32> -> vector<8x8xf32>
    %c0_28 = arith.constant 0 : index
    %c0_29 = arith.constant 0 : index
    %48 = vector.load %arg10[%c0_28, %c0_29] : memref<1x8xf32, #tpu.memory_space<vmem>>, vector<1x8xf32>
    %49 = vector.broadcast %48 : vector<1x8xf32> to vector<8x8xf32>
    %50 = arith.addf %47, %49 : vector<8x8xf32>
    %c0_30 = arith.constant 0 : index
    %c0_31 = arith.constant 0 : index
    %51 = vector.load %arg11[%c0_30, %c0_31] : memref<8x8xf32, #tpu.memory_space<vmem>>, vector<8x8xf32>
    tpu.vector_store %arg11[%c0_30, %c0_31], %50 {strides = array<i32>} : memref<8x8xf32, #tpu.memory_space<vmem>>, vector<8x8xf32>,
    return
  }
  func.func @transform_0(%arg0: i32) -> (i32, i32, i32) {
    %c0_i32 = arith.constant 0 : i32
    %c0_i32_0 = arith.constant 0 : i32
    %c0_i32_1 = arith.constant 0 : i32
    return %arg0, %c0_i32, %c0_i32_0 : i32, i32, i32
  }
  func.func @transform_1(%arg0: i32) -> (i32, i32) {
    %c0_i32 = arith.constant 0 : i32
    %c0_i32_0 = arith.constant 0 : i32
    return %arg0, %c0_i32 : i32, i32
  }
  func.func @transform_2(%arg0: i32) -> (i32, i32) {
    %c0_i32 = arith.constant 0 : i32
    %c0_i32_0 = arith.constant 0 : i32
    %c0_i32_1 = arith.constant 0 : i32
    return %c0_i32, %c0_i32_0 : i32, i32
  }
  func.func @transform_3(%arg0: i32) -> (i32, i32) {
    %c0_i32 = arith.constant 0 : i32
    %c0_i32_0 = arith.constant 0 : i32
    %c0_i32_1 = arith.constant 0 : i32
    return %c0_i32, %c0_i32_0 : i32, i32
  }
  func.func @transform_4(%arg0: i32) -> (i32, i32) {
    %c0_i32 = arith.constant 0 : i32
    %c0_i32_0 = arith.constant 0 : i32
    %c0_i32_1 = arith.constant 0 : i32
    return %c0_i32, %c0_i32_0 : i32, i32
  }
  func.func @transform_5(%arg0: i32) -> (i32, i32) {
    %c0_i32 = arith.constant 0 : i32
    %c0_i32_0 = arith.constant 0 : i32
    %c0_i32_1 = arith.constant 0 : i32
    return %c0_i32, %c0_i32_0 : i32, i32
  }
  func.func @transform_6(%arg0: i32) -> (i32, i32) {
    %c0_i32 = arith.constant 0 : i32
    %c0_i32_0 = arith.constant 0 : i32
    %c0_i32_1 = arith.constant 0 : i32
    return %c0_i32, %c0_i32_0 : i32, i32
  }
  func.func @transform_7(%arg0: i32) -> (i32, i32) {
    %c0_i32 = arith.constant 0 : i32
    %c0_i32_0 = arith.constant 0 : i32
    %c0_i32_1 = arith.constant 0 : i32
    return %c0_i32, %c0_i32_0 : i32, i32
  }
  func.func @transform_8(%arg0: i32) -> (i32, i32) {
    %c0_i32 = arith.constant 0 : i32
    %c0_i32_0 = arith.constant 0 : i32
    %c0_i32_1 = arith.constant 0 : i32
    return %c0_i32, %c0_i32_0 : i32, i32
  }
  func.func @transform_9(%arg0: i32) -> (i32, i32) {
    %c0_i32 = arith.constant 0 : i32
    %c0_i32_0 = arith.constant 0 : i32
    %c0_i32_1 = arith.constant 0 : i32
    return %c0_i32, %c0_i32_0 : i32, i32
  }
  func.func @transform_10(%arg0: i32) -> (i32, i32) {
    %c0_i32 = arith.constant 0 : i32
    %c0_i32_0 = arith.constant 0 : i32
    return %arg0, %c0_i32 : i32, i32
  }
}

</mosaic_0001>

<llo_original>
// kernel: tpu_custom_call.1
$region0: #{tpu_custom_call.1}
  #allocation0 [shape = 'u32[]', space=smem, size = 0x4, offset = 0x4, fixed_abs, tag = 'smem constant byte address 0x4 - core index']
  #allocation1 [shape = 'u32[72,128]{1,0:T(1,128)}', space=vmem, size = 0x9000, scoped, tag = 'internal scratch']
  %s0 = inlined_call_operand.vmem [shape: f32[8,8,16], index: 0, kind: input, shape index: {}]
  %s1 = inlined_call_operand.vmem [shape: s32[8,1], index: 1, kind: input, shape index: {}]
  %s2 = inlined_call_operand.vmem [shape: f32[16,128], index: 2, kind: input, shape index: {}]
  %s3 = inlined_call_operand.vmem [shape: f32[1,128], index: 3, kind: input, shape index: {}]
  %s4 = inlined_call_operand.vmem [shape: f32[128,64], index: 4, kind: input, shape index: {}]
  %s5 = inlined_call_operand.vmem [shape: f32[1,64], index: 5, kind: input, shape index: {}]
  %s6 = inlined_call_operand.vmem [shape: f32[64,32], index: 6, kind: input, shape index: {}]
  %s7 = inlined_call_operand.vmem [shape: f32[1,32], index: 7, kind: input, shape index: {}]
  %s8 = inlined_call_operand.vmem [shape: f32[32,8], index: 8, kind: input, shape index: {}]
  %s9 = inlined_call_operand.vmem [shape: f32[1,8], index: 9, kind: input, shape index: {}]
  %s10 = inlined_call_operand.hbm [shape: f32[8,8], index: 10, kind: output, shape index: {}]
  %s11 = sld [smem:[#allocation0]]
  $region50: #{tpu_custom_call.1} parent=0
    _
  %s13 = ssub.s32 1, %s11
  %s14 = scalar_select 0, %s13, %s11
  $region1: #{tpu_custom_call.1} parent=0
    #allocation2 [shape = 'u8[4096]{0}', space=vmem, size = 0x1000, scoped, tag = 'output window, operand 0, single buffered']
    #allocation3 [shape = 's32[1]{0}', space=sflag, size = 0x4, scoped, tag = 'scoped memory for tpu_custom_call.1']
    %15 = vsyncpa [#allocation3], 0
    // Predicated region
    $region2: #{tpu_custom_call.1} parent=1 // pred_check
      _
    $region3: #{tpu_custom_call.1} parent=1 // pred_check_branch
      %17 = sbr.rel (0) target = $region5
    $region4: #{tpu_custom_call.1} parent=1 // pred_region
      _
    $region5: #{tpu_custom_call.1} parent=1 // pred_fallthru
      _
    // Predicated region
    $region6: #{tpu_custom_call.1} parent=1 // pred_check
      _
    $region7: #{tpu_custom_call.1} parent=1 // pred_check_branch
      %19 = sbr.rel (0) target = $region9
    $region8: #{tpu_custom_call.1} parent=1 // pred_region
      _
    $region9: #{tpu_custom_call.1} parent=1 // pred_fallthru
      _
    // Predicated region
    $region10: #{tpu_custom_call.1} parent=1 // pred_check
      _
    $region11: #{tpu_custom_call.1} parent=1 // pred_check_branch
      %21 = sbr.rel (0) target = $region13
    $region12: #{tpu_custom_call.1} parent=1 // pred_region
      _
    $region13: #{tpu_custom_call.1} parent=1 // pred_fallthru
      _
    // Predicated region
    $region14: #{tpu_custom_call.1} parent=1 // pred_check
      _
    $region15: #{tpu_custom_call.1} parent=1 // pred_check_branch
      %23 = sbr.rel (0) target = $region17
    $region16: #{tpu_custom_call.1} parent=1 // pred_region
      _
    $region17: #{tpu_custom_call.1} parent=1 // pred_fallthru
      _
    // Predicated region
    $region18: #{tpu_custom_call.1} parent=1 // pred_check
      _
    $region19: #{tpu_custom_call.1} parent=1 // pred_check_branch
      %25 = sbr.rel (0) target = $region21
    $region20: #{tpu_custom_call.1} parent=1 // pred_region
      _
    $region21: #{tpu_custom_call.1} parent=1 // pred_fallthru
      _
    // Predicated region
    $region22: #{tpu_custom_call.1} parent=1 // pred_check
      _
    $region23: #{tpu_custom_call.1} parent=1 // pred_check_branch
      %27 = sbr.rel (0) target = $region25
    $region24: #{tpu_custom_call.1} parent=1 // pred_region
      _
    $region25: #{tpu_custom_call.1} parent=1 // pred_fallthru
      _
    // Predicated region
    $region26: #{tpu_custom_call.1} parent=1 // pred_check
      _
    $region27: #{tpu_custom_call.1} parent=1 // pred_check_branch
      %29 = sbr.rel (0) target = $region29
    $region28: #{tpu_custom_call.1} parent=1 // pred_region
      _
    $region29: #{tpu_custom_call.1} parent=1 // pred_fallthru
      _
    // Predicated region
    $region30: #{tpu_custom_call.1} parent=1 // pred_check
      _
    $region31: #{tpu_custom_call.1} parent=1 // pred_check_branch
      %31 = sbr.rel (0) target = $region33
    $region32: #{tpu_custom_call.1} parent=1 // pred_region
      _
    $region33: #{tpu_custom_call.1} parent=1 // pred_fallthru
      _
    // Predicated region
    $region34: #{tpu_custom_call.1} parent=1 // pred_check
      _
    $region35: #{tpu_custom_call.1} parent=1 // pred_check_branch
      %33 = sbr.rel (0) target = $region37
    $region36: #{tpu_custom_call.1} parent=1 // pred_region
      _
    $region37: #{tpu_custom_call.1} parent=1 // pred_fallthru
      _
    // Predicated region
    $region38: #{tpu_custom_call.1} parent=1 // pred_check
      _
    $region39: #{tpu_custom_call.1} parent=1 // pred_check_branch
      %35 = sbr.rel (0) target = $region41
    $region40: #{tpu_custom_call.1} parent=1 // pred_region
      _
    $region41: #{tpu_custom_call.1} parent=1 // pred_fallthru
      _
    %v36 = vld [vmem:[%s0] sm:$0xff]
    %v37 = vld [vmem:[%s0 + $0x8] sm:$0xff]
    %v38 = vld [vmem:[%s0 + $0x10] sm:$0xff]
    %v39 = vld [vmem:[%s0 + $0x18] sm:$0xff]
    %v40 = vld [vmem:[%s0 + $0x20] sm:$0xff]
    %v41 = vld [vmem:[%s0 + $0x28] sm:$0xff]
    %v42 = vld [vmem:[%s0 + $0x30] sm:$0xff]
    %v43 = vld [vmem:[%s0 + $0x38] sm:$0xff]
    %v44 = vld [vmem:[%s1] sm:$0xff]
    %v45 = vsub.s32 %v44, 1
    %vm46 = vcmp.gt.s32.totalorder %v45, 0
    %v47 = vsel %vm46, %v45, 0
    %vm48 = vcmp.lt.s32.totalorder %v47, 7
    %v49 = vsel %vm48, %v47, 7
    %v50 = vlaneseq
    %v51 = vshrl.u32 %v50, 7
    %v52 = vrot.slane %v49, 1
    %v53 = vrot.slane %v49, 2
    %v54 = vrot.slane %v49, 3
    %v55 = vrot.slane %v49, 4
    %v56 = vrot.slane %v49, 5
    %v57 = vrot.slane %v49, 6
    %v58 = vrot.slane %v49, 7
    %v59 = vperm.slane %v49, 0
    %v60 = vperm.slane %v52, 0
    %v61 = vperm.slane %v53, 0
    %v62 = vperm.slane %v54, 0
    %v63 = vperm.slane %v55, 0
    %v64 = vperm.slane %v56, 0
    %v65 = vperm.slane %v57, 0
    %v66 = vperm.slane %v58, 0
    %67 = vset.pattern.permute.xlu0 0
    %68 = vperm.xlu0 %67, %v59
    %v69 = vpop.permute.xlu0 %68
    %70 = vset.pattern.permute.xlu0 0
    %71 = vperm.xlu0 %70, %v60
    %v72 = vpop.permute.xlu0 %71
    %73 = vset.pattern.permute.xlu0 0
    %74 = vperm.xlu0 %73, %v61
    %v75 = vpop.permute.xlu0 %74
    %76 = vset.pattern.permute.xlu0 0
    %77 = vperm.xlu0 %76, %v62
    %v78 = vpop.permute.xlu0 %77
    %79 = vset.pattern.permute.xlu0 0
    %80 = vperm.xlu0 %79, %v63
    %v81 = vpop.permute.xlu0 %80
    %82 = vset.pattern.permute.xlu0 0
    %83 = vperm.xlu0 %82, %v64
    %v84 = vpop.permute.xlu0 %83
    %85 = vset.pattern.permute.xlu0 0
    %86 = vperm.xlu0 %85, %v65
    %v87 = vpop.permute.xlu0 %86
    %88 = vset.pattern.permute.xlu0 0
    %89 = vperm.xlu0 %88, %v66
    %v90 = vpop.permute.xlu0 %89
    %vm91 = vcmp.eq.s32.totalorder %v51, %v69
    %vm92 = vcmp.eq.s32.totalorder %v51, %v72
    %vm93 = vcmp.eq.s32.totalorder %v51, %v75
    %vm94 = vcmp.eq.s32.totalorder %v51, %v78
    %vm95 = vcmp.eq.s32.totalorder %v51, %v81
    %vm96 = vcmp.eq.s32.totalorder %v51, %v84
    %vm97 = vcmp.eq.s32.totalorder %v51, %v87
    %vm98 = vcmp.eq.s32.totalorder %v51, %v90
    %v99 = vsel %vm91, 1, 0
    %v100 = vsel %vm92, 1, 0
    %v101 = vsel %vm93, 1, 0
    %v102 = vsel %vm94, 1, 0
    %v103 = vsel %vm95, 1, 0
    %v104 = vsel %vm96, 1, 0
    %v105 = vsel %vm97, 1, 0
    %v106 = vsel %vm98, 1, 0
    %v107 = vcvt.s32.f32 %v99
    %v108 = vcvt.s32.f32 %v100
    %v109 = vcvt.s32.f32 %v101
    %v110 = vcvt.s32.f32 %v102
    %v111 = vcvt.s32.f32 %v103
    %v112 = vcvt.s32.f32 %v104
    %v113 = vcvt.s32.f32 %v105
    %v114 = vcvt.s32.f32 %v106
    %v115 = vmul.f32 %v36, %v107
    %v116 = vmul.f32 %v37, %v108
    %v117 = vmul.f32 %v38, %v109
    %v118 = vmul.f32 %v39, %v110
    %v119 = vmul.f32 %v40, %v111
    %v120 = vmul.f32 %v41, %v112
    %v121 = vmul.f32 %v42, %v113
    %v122 = vmul.f32 %v43, %v114
    %vm123 = vcmask 130048
    %v124 = vsel %vm123, %v115, 0.0
    %v125 = vrot.slane %v124, 4
    %v126 = vadd.f32 %v124, %v125
    %v127 = vrot.slane %v126, 2
    %v128 = vadd.f32 %v126, %v127
    %v129 = vrot.slane %v128, 1
    %v130 = vadd.f32 %v128, %v129
    %v131 = vsel %vm123, %v116, 0.0
    %v132 = vrot.slane %v131, 4
    %v133 = vadd.f32 %v131, %v132
    %v134 = vrot.slane %v133, 2
    %v135 = vadd.f32 %v133, %v134
    %v136 = vrot.slane %v135, 1
    %v137 = vadd.f32 %v135, %v136
    %v138 = vsel %vm123, %v117, 0.0
    %v139 = vrot.slane %v138, 4
    %v140 = vadd.f32 %v138, %v139
    %v141 = vrot.slane %v140, 2
    %v142 = vadd.f32 %v140, %v141
    %v143 = vrot.slane %v142, 1
    %v144 = vadd.f32 %v142, %v143
    %v145 = vsel %vm123, %v118, 0.0
    %v146 = vrot.slane %v145, 4
    %v147 = vadd.f32 %v145, %v146
    %v148 = vrot.slane %v147, 2
    %v149 = vadd.f32 %v147, %v148
    %v150 = vrot.slane %v149, 1
    %v151 = vadd.f32 %v149, %v150
    %v152 = vsel %vm123, %v119, 0.0
    %v153 = vrot.slane %v152, 4
    %v154 = vadd.f32 %v152, %v153
    %v155 = vrot.slane %v154, 2
    %v156 = vadd.f32 %v154, %v155
    %v157 = vrot.slane %v156, 1
    %v158 = vadd.f32 %v156, %v157
    %v159 = vsel %vm123, %v120, 0.0
    %v160 = vrot.slane %v159, 4
    %v161 = vadd.f32 %v159, %v160
    %v162 = vrot.slane %v161, 2
    %v163 = vadd.f32 %v161, %v162
    %v164 = vrot.slane %v163, 1
    %v165 = vadd.f32 %v163, %v164
    %v166 = vsel %vm123, %v121, 0.0
    %v167 = vrot.slane %v166, 4
    %v168 = vadd.f32 %v166, %v167
    %v169 = vrot.slane %v168, 2
    %v170 = vadd.f32 %v168, %v169
    %v171 = vrot.slane %v170, 1
    %v172 = vadd.f32 %v170, %v171
    %v173 = vsel %vm123, %v122, 0.0
    %v174 = vrot.slane %v173, 4
    %v175 = vadd.f32 %v173, %v174
    %v176 = vrot.slane %v175, 2
    %v177 = vadd.f32 %v175, %v176
    %v178 = vrot.slane %v177, 1
    %v179 = vadd.f32 %v177, %v178
    %v180 = vld [vmem:[%s2] sm:$0xff]
    %v181 = vld [vmem:[%s2 + $0x8] sm:$0xff]
    %v182 = vld [vmem:[%s3] sm:$0x1]
    %v184 = vperm.slane %v182, 0
    %vm194 = vcmask 1041409
    %v195 = vsel %vm194, %v137, %v130
    %vm196 = vcmask 1042434
    %v197 = vsel %vm196, %v144, %v195
    %vm198 = vcmask 1043459
    %v199 = vsel %vm198, %v151, %v197
    %vm200 = vcmask 1044484
    %v201 = vsel %vm200, %v158, %v199
    %vm202 = vcmask 1045509
    %v203 = vsel %vm202, %v165, %v201
    %vm204 = vcmask 1046534
    %v205 = vsel %vm204, %v172, %v203
    %vm206 = vcmask 1047559
    %v207 = vsel %vm206, %v179, %v205
    %v208 = vsel %vm123, %v207, 0
    %210 = vmatpush.msra.mxu0 0.0
    %211 = vmatpush.msra.mxu0 0.0
    %212 = vmatpush.msra.mxu0 0.0
    %213 = vmatpush.msra.mxu0 0.0
    %214 = vmatpush.msra.mxu0 0.0
    %215 = vmatpush.msra.mxu0 0.0
    %216 = vmatpush.msra.mxu0 0.0
    %217 = vmatpush.msra.mxu0 0.0
    %218 = vmatpush.msra.mxu0 0.0
    %219 = vmatpush.msra.mxu0 0.0
    %220 = vmatpush.msra.mxu0 0.0
    %221 = vmatpush.msra.mxu0 0.0
    %222 = vmatpush.msra.mxu0 0.0
    %223 = vmatpush.msra.mxu0 0.0
    %224 = vmatpush.msra.mxu0 %v181
    %225 = vmatpush.msra.mxu0 %v180
    %226 = vmatmul.f32.gmra.mxu0 %v208
    %v227 = vpop.f32.mrf.mxu0
    %v228 = vadd.f32 %v184, %v227
    %229 = vdwg.mxu0
    %vm230 = vcmp.gt.f32.partialorder %v228, 0.0
    %v231 = vmul.f32 %v228, 0.3
    %v232 = vsel %vm230, %v228, %v231
    %v233 = vld [vmem:[%s4] sm:$0xff]
    %v234 = vld [vmem:[%s4 + $0x8] sm:$0xff]
    %v235 = vld [vmem:[%s4 + $0x10] sm:$0xff]
    %v236 = vld [vmem:[%s4 + $0x18] sm:$0xff]
    %v237 = vld [vmem:[%s4 + $0x20] sm:$0xff]
    %v238 = vld [vmem:[%s4 + $0x28] sm:$0xff]
    %v239 = vld [vmem:[%s4 + $0x30] sm:$0xff]
    %v240 = vld [vmem:[%s4 + $0x38] sm:$0xff]
    %v241 = vld [vmem:[%s4 + $0x40] sm:$0xff]
    %v242 = vld [vmem:[%s4 + $0x48] sm:$0xff]
    %v243 = vld [vmem:[%s4 + $0x50] sm:$0xff]
    %v244 = vld [vmem:[%s4 + $0x58] sm:$0xff]
    %v245 = vld [vmem:[%s4 + $0x60] sm:$0xff]
    %v246 = vld [vmem:[%s4 + $0x68] sm:$0xff]
    %v247 = vld [vmem:[%s4 + $0x70] sm:$0xff]
    %v248 = vld [vmem:[%s4 + $0x78] sm:$0xff]
    %v249 = vld [vmem:[%s5] sm:$0x1]
    %v251 = vperm.slane %v249, 0
    %253 = vmatpush.msra.mxu0 %v248
    %254 = vmatpush.msra.mxu0 %v247
    %255 = vmatpush.msra.mxu0 %v246
    %256 = vmatpush.msra.mxu0 %v245
    %257 = vmatpush.msra.mxu0 %v244
    %258 = vmatpush.msra.mxu0 %v243
    %259 = vmatpush.msra.mxu0 %v242
    %260 = vmatpush.msra.mxu0 %v241
    %261 = vmatpush.msra.mxu0 %v240
    %262 = vmatpush.msra.mxu0 %v239
    %263 = vmatpush.msra.mxu0 %v238
    %264 = vmatpush.msra.mxu0 %v237
    %265 = vmatpush.msra.mxu0 %v236
    %266 = vmatpush.msra.mxu0 %v235
    %267 = vmatpush.msra.mxu0 %v234
    %268 = vmatpush.msra.mxu0 %v233
    %269 = vmatmul.f32.gmra.mxu0 %v232
    %v270 = vpop.f32.mrf.mxu0
    %v271 = vadd.f32 %v251, %v270
    %272 = vdwg.mxu0
    %vm273 = vcmp.gt.f32.partialorder %v271, 0.0
    %v274 = vmul.f32 %v271, 0.3
    %v275 = vsel %vm273, %v271, %v274
    %v276 = vld [vmem:[%s6] sm:$0xff]
    %v277 = vld [vmem:[%s6 + $0x8] sm:$0xff]
    %v278 = vld [vmem:[%s6 + $0x10] sm:$0xff]
    %v279 = vld [vmem:[%s6 + $0x18] sm:$0xff]
    %v280 = vld [vmem:[%s6 + $0x20] sm:$0xff]
    %v281 = vld [vmem:[%s6 + $0x28] sm:$0xff]
    %v282 = vld [vmem:[%s6 + $0x30] sm:$0xff]
    %v283 = vld [vmem:[%s6 + $0x38] sm:$0xff]
    %v284 = vld [vmem:[%s7] sm:$0x1]
    %v286 = vperm.slane %v284, 0
    %vm288 = vcmask 523264
    %v290 = vsel %vm288, %v275, 0
    %292 = vmatpush.msra.mxu0 0.0
    %293 = vmatpush.msra.mxu0 0.0
    %294 = vmatpush.msra.mxu0 0.0
    %295 = vmatpush.msra.mxu0 0.0
    %296 = vmatpush.msra.mxu0 0.0
    %297 = vmatpush.msra.mxu0 0.0
    %298 = vmatpush.msra.mxu0 0.0
    %299 = vmatpush.msra.mxu0 0.0
    %300 = vmatpush.msra.mxu0 %v283
    %301 = vmatpush.msra.mxu0 %v282
    %302 = vmatpush.msra.mxu0 %v281
    %303 = vmatpush.msra.mxu0 %v280
    %304 = vmatpush.msra.mxu0 %v279
    %305 = vmatpush.msra.mxu0 %v278
    %306 = vmatpush.msra.mxu0 %v277
    %307 = vmatpush.msra.mxu0 %v276
    %308 = vmatmul.f32.gmra.mxu0 %v290
    %v309 = vpop.f32.mrf.mxu0
    %v310 = vadd.f32 %v286, %v309
    %311 = vdwg.mxu0
    %vm312 = vcmp.gt.f32.partialorder %v310, 0.0
    %v313 = vmul.f32 %v310, 0.3
    %v314 = vsel %vm312, %v310, %v313
    %v315 = vld [vmem:[%s8] sm:$0xff]
    %v316 = vld [vmem:[%s8 + $0x8] sm:$0xff]
    %v317 = vld [vmem:[%s8 + $0x10] sm:$0xff]
    %v318 = vld [vmem:[%s8 + $0x18] sm:$0xff]
    %v319 = vld [vmem:[%s9] sm:$0x1]
    %v321 = vperm.slane %v319, 0
    %vm323 = vcmask 261120
    %v325 = vsel %vm323, %v314, 0
    %327 = vmatpush.msra.mxu0 0.0
    %328 = vmatpush.msra.mxu0 0.0
    %329 = vmatpush.msra.mxu0 0.0
    %330 = vmatpush.msra.mxu0 0.0
    %331 = vmatpush.msra.mxu0 0.0
    %332 = vmatpush.msra.mxu0 0.0
    %333 = vmatpush.msra.mxu0 0.0
    %334 = vmatpush.msra.mxu0 0.0
    %335 = vmatpush.msra.mxu0 0.0
    %336 = vmatpush.msra.mxu0 0.0
    %337 = vmatpush.msra.mxu0 0.0
    %338 = vmatpush.msra.mxu0 0.0
    %339 = vmatpush.msra.mxu0 %v318
    %340 = vmatpush.msra.mxu0 %v317
    %341 = vmatpush.msra.mxu0 %v316
    %342 = vmatpush.msra.mxu0 %v315
    %343 = vmatmul.f32.gmra.mxu0 %v325
    %v344 = vpop.f32.mrf.mxu0
    %v345 = vadd.f32 %v321, %v344
    %346 = vdwg.mxu0
    %vm347 = vcmask 64512
    %348 = vst.msk [vmem:[#allocation2] sm:$0xff] %vm347, %v345
    // Predicated region
    $region42: #{tpu_custom_call.1} parent=1 // pred_check
      _
    $region43: #{tpu_custom_call.1} parent=1 // pred_check_branch
      %350 = sbr.rel (0) target = $region45
    $region44: #{tpu_custom_call.1} parent=1 // pred_region
      %352 = vsyncadd [#allocation3], 0
      %s354 = sshll.u32 [#allocation2], 4
      %s355 = int_to_ptr.vmem [resolvable:$true] %s354
      %s356 = sshll.u32 %s10, 4
      %s357 = int_to_ptr.hbm [resolvable:$true] %s356
      %359 = dma.vmem_to_hbm [thread:$0]  %s355, 128, %s357, [#allocation3]
    $region45: #{tpu_custom_call.1} parent=1 // pred_fallthru
      _
    // Predicated region
    $region46: #{tpu_custom_call.1} parent=1 // pred_check
      _
    $region47: #{tpu_custom_call.1} parent=1 // pred_check_branch
      %361 = sbr.rel (0) target = $region49
    $region48: #{tpu_custom_call.1} parent=1 // pred_region
      %363 = dma.done [#allocation3], 128
    $region49: #{tpu_custom_call.1} parent=1 // pred_fallthru
      _
    %364 = vsyncpa [#allocation3], 1

</llo_original>
